<compile_context>
chip_gen: v5e
topology: v5e:2x2
jax: 0.10.0
libtpu: 0.0.40
codegen_flags: <defaults>
</compile_context>

<pallas_src>
import jax
import jax.numpy as jnp
from jax.experimental import pallas as pl
from jax.experimental.pallas import tpu as pltpu


def _round_up(x, m):
    return (x + m - 1) // m * m


def edge_mlp_kernel(x_ref, w1t_ref, b1_ref, w2t_ref, b2_ref, w3t_ref, b3_ref, o_ref):
    """Edges-on-lanes 3-layer MLP.

    x_ref  : (K, te)       bf16   concat [dst_f | dst_h | src_f | dist], edges on lanes
    w1t_ref: (H1, K)       bf16   (W1_cat)^T
    b1_ref : (H1, 1)       f32
    w2t_ref: (H1, H1)      bf16
    b2_ref : (H1, 1)       f32
    w3t_ref: (out, H1)     bf16
    b3_ref : (out, 1)      f32
    o_ref  : (out, te)     f32    lane-dense output tile
    """
    f32 = jnp.float32

    # Layer 1: single MXU matmul (distance folded into K), f32 accumulate.
    h1 = jnp.dot(w1t_ref[...], x_ref[...], preferred_element_type=f32)
    h1 = jnp.maximum(h1 + b1_ref[...], 0.0)

    # Layer 2.
    h2 = jnp.dot(w2t_ref[...], h1.astype(w2t_ref.dtype), preferred_element_type=f32)
    h2 = jnp.maximum(h2 + b2_ref[...], 0.0)

    # Layer 3.
    out = jnp.dot(w3t_ref[...], h2.astype(w3t_ref.dtype), preferred_element_type=f32)
    o_ref[...] = (out + b3_ref[...]).astype(o_ref.dtype)


def prepare_params(params, feat_size, hidden_rep_size, compute_dtype=jnp.bfloat16):
    """One-time weight prep (hoisted out of the forward path).

    Builds W1 for the de-duplicated concat layout [dst_f | dst_h | src_f | dist]
    (the two dst_hidden row blocks are pre-summed exactly in f32), transposes all
    weights for the edges-on-lanes orientation, and casts matmul weights to bf16.
    """
    w1, b1, w2, b2, w3, b3 = params
    F, H = feat_size, hidden_rep_size
    assert w1.shape[0] == 2 * F + 2 * H + 1, "W1 rows must match the concat layout"
    cd = compute_dtype

    w1_cat = jnp.concatenate(
        [
            w1[:F],                                     # dst node features
            w1[F:F + H] + w1[2 * F + H:2 * F + 2 * H],  # dst hidden rep (appears twice)
            w1[F + H:2 * F + H],                        # src node features
            w1[2 * F + 2 * H:],                         # distance row
        ],
        axis=0,
    )                                                    # [K = 2F+2H+1 - H, hidden]

    w1t = jnp.asarray(w1_cat.T, dtype=cd)                # [hidden, K]
    w2t = jnp.asarray(w2.T, dtype=cd)                    # [hidden, hidden]
    w3t = jnp.asarray(w3.T, dtype=cd)                    # [out, hidden]
    b1c = jnp.asarray(b1, jnp.float32).reshape(-1, 1)    # [hidden, 1]
    b2c = jnp.asarray(b2, jnp.float32).reshape(-1, 1)    # [hidden, 1]
    b3c = jnp.asarray(b3, jnp.float32).reshape(-1, 1)    # [out, 1]
    return (w1t, b1c, w2t, b2c, w3t, b3c)


def edge_network_forward(dst_node_features, dst_node_hidden_rep,
                         src_node_features, distance, prepared_params,
                         *, tile_edges=512):
    """Reproduces EdgeNetwork.forward.

    input_data = cat([dst_feat, dst_hidden, src_feat, dst_hidden, dist[:, None]], 1)
    output     = Linear -> ReLU -> Linear -> ReLU -> Linear
    returns {'edge hidden representation': output}   (f32, shape [E, output_size])
    """
    w1t, b1, w2t, b2, w3t, b3 = prepared_params
    E, F = dst_node_features.shape
    H = dst_node_hidden_rep.shape[1]
    outsize = w3t.shape[0]
    K = w1t.shape[1]
    assert K == F + H + F + 1, "prepared W1 does not match the input feature sizes"
    cd = w1t.dtype

    if E == 0:
        return {'edge hidden representation': jnp.zeros((0, outsize), jnp.float32)}

    # Edges-on-lanes concat: [K, E], built in a single pass (no f32 intermediate).
    x_t = jnp.concatenate(
        [
            dst_node_features.T.astype(cd),
            dst_node_hidden_rep.T.astype(cd),
            src_node_features.T.astype(cd),
            distance[None, :].astype(cd),
        ],
        axis=0,
    )

    # Lane (edge) tiling: multiple of 128; cap at ceil(E/2) so the "parallel"
    # grid has >= 2 steps whenever E > 128 (keeps both v7x TensorCores busy).
    te = max(128, (tile_edges // 128) * 128)
    te = min(te, _round_up((E + 1) // 2, 128))
    e_pad = _round_up(E, te)
    if e_pad != E:
        x_t = jnp.pad(x_t, ((0, 0), (0, e_pad - E)))
    grid = (e_pad // te,)

    def rep(arr):  # grid-invariant (replicated) operand: weights / biases
        return pl.BlockSpec(arr.shape, lambda i: (0,) * arr.ndim)

    out_t = pl.pallas_call(
        edge_mlp_kernel,
        out_shape=jax.ShapeDtypeStruct((outsize, e_pad), jnp.float32),
        grid_spec=pltpu.PrefetchScalarGridSpec(
            num_scalar_prefetch=0,
            grid=grid,
            in_specs=[
                pl.BlockSpec((K, te), lambda i: (0, i)),   # activations, edges on lanes
                rep(w1t), rep(b1),
                rep(w2t), rep(b2),
                rep(w3t), rep(b3),
            ],
            out_specs=pl.BlockSpec((outsize, te), lambda i: (0, i)),
        ),
        compiler_params=pltpu.CompilerParams(
            dimension_semantics=("parallel",),   # shard edge tiles across TCs (v7x)
        ),
    )(x_t, w1t, b1, w2t, b2, w3t, b3)

    out = out_t[:, :E].T   # back to [E, outsize]
    return {'edge hidden representation': out}


def init_params(key, inputsize, hidden_layer_size, output_size):
    """Deterministic init mimicking PyTorch nn.Linear default (uniform +/- 1/sqrt(fan_in))."""
    def linear(k, fan_in, fan_out):
        kw, kb = jax.random.split(k)
        bound = 1.0 / jnp.sqrt(fan_in)
        w = jax.random.uniform(kw, (fan_in, fan_out), jnp.float32, -bound, bound)
        b = jax.random.uniform(kb, (1, fan_out), jnp.float32, -bound, bound)
        return w, b

    k1, k2, k3 = jax.random.split(key, 3)
    w1, b1 = linear(k1, inputsize, hidden_layer_size)
    w2, b2 = linear(k2, hidden_layer_size, hidden_layer_size)
    w3, b3 = linear(k3, hidden_layer_size, output_size)
    return (w1, b1, w2, b2, w3, b3)


def reference_forward_matched(dst_f, dst_h, src_f, dist, params, cd=jnp.bfloat16):
    """Pure-JAX reference with the SAME bf16-input / f32-accumulate numerics as the kernel."""
    w1, b1, w2, b2, w3, b3 = params
    F, H = dst_f.shape[1], dst_h.shape[1]
    f32 = jnp.float32
    w1_cat = jnp.concatenate(
        [w1[:F], w1[F:F + H] + w1[2 * F + H:2 * F + 2 * H],
         w1[F + H:2 * F + H], w1[2 * F + 2 * H:]], axis=0).astype(cd)
    x_cat = jnp.concatenate([dst_f, dst_h, src_f, dist[:, None]], axis=1).astype(cd)
    h1 = jnp.maximum(jnp.dot(x_cat, w1_cat, preferred_element_type=f32) + b1, 0.0)
    h2 = jnp.maximum(
        jnp.dot(h1.astype(cd), w2.astype(cd), preferred_element_type=f32) + b2, 0.0)
    return jnp.dot(h2.astype(cd), w3.astype(cd), preferred_element_type=f32) + b3


def reference_forward_f32(dst_f, dst_h, src_f, dist, params):
    """Original-semantics pure-f32 reference (concat with duplicated dst_hidden + 3 linears)."""
    x = jnp.concatenate((dst_f, dst_h, src_f, dst_h, dist[:, None]), axis=1)
    w1, b1, w2, b2, w3, b3 = params
    h = jnp.maximum(x @ w1 + b1, 0.0)
    h = jnp.maximum(h @ w2 + b2, 0.0)
    return h @ w3 + b3


if __name__ == "__main__":
    key = jax.random.PRNGKey(0)

    # E edges, node feature dim F, node hidden-rep dim H, scalar distance per edge.
    # inputsize = F + H + F + H + 1  (dst hidden rep used twice, as in the reference).
    E, F, H = 1024, 7, 12
    hidden_layer_size = 32
    output_size = 16
    inputsize = 2 * F + 2 * H + 1  # 39

    k_params, k_df, k_dh, k_sf, k_d = jax.random.split(key, 5)
    params = init_params(k_params, inputsize, hidden_layer_size, output_size)
    prepared = prepare_params(params, F, H)     # one-time weight prep, hoisted

    dst_node_features   = jax.random.normal(k_df, (E, F), jnp.float32)
    dst_node_hidden_rep = jax.random.normal(k_dh, (E, H), jnp.float32)
    src_node_features   = jax.random.normal(k_sf, (E, F), jnp.float32)
    distance            = jax.random.uniform(k_d, (E,), jnp.float32)

    result = edge_network_forward(dst_node_features, dst_node_hidden_rep,
                                  src_node_features, distance, prepared)
    out = result['edge hidden representation']
    jax.block_until_ready(out)
    assert out.shape == (E, output_size)

    ref_matched = reference_forward_matched(dst_node_features, dst_node_hidden_rep,
                                            src_node_features, distance, params)
    assert jnp.allclose(out, ref_matched, atol=5e-3, rtol=5e-3), \
        "mismatch vs bf16-matched reference"

    ref_f32 = reference_forward_f32(dst_node_features, dst_node_hidden_rep,
                                    src_node_features, distance, params)
    assert jnp.allclose(out, ref_f32, atol=5e-2, rtol=5e-2), \
        "mismatch vs f32 reference"

    # Exercise the padding path (E not a multiple of the tile / of 256).
    E2 = 333
    result2 = edge_network_forward(dst_node_features[:E2], dst_node_hidden_rep[:E2],
                                   src_node_features[:E2], distance[:E2], prepared)
    out2 = result2['edge hidden representation']
    jax.block_until_ready(out2)
    assert out2.shape == (E2, output_size)
    assert jnp.allclose(out2, ref_f32[:E2], atol=5e-2, rtol=5e-2), \
        "mismatch vs f32 reference (padded E)"

    print("KERNEL_OK")
</pallas_src>

<mosaic_0001>
module attributes {stable_mosaic.version = 11 : i64} {
  func.func @edge_mlp_kernel(%arg0: i32, %arg1: memref<27x512xbf16, #tpu.memory_space<vmem>>, %arg2: memref<32x27xbf16, #tpu.memory_space<vmem>>, %arg3: memref<32x1xf32, #tpu.memory_space<vmem>>, %arg4: memref<32x32xbf16, #tpu.memory_space<vmem>>, %arg5: memref<32x1xf32, #tpu.memory_space<vmem>>, %arg6: memref<16x32xbf16, #tpu.memory_space<vmem>>, %arg7: memref<16x1xf32, #tpu.memory_space<vmem>>, %arg8: memref<16x512xf32, #tpu.memory_space<vmem>>) attributes {dimension_semantics = [#tpu.dimension_semantics<parallel>], iteration_bounds = array<i64: 2>, scalar_prefetch = 0 : i64, scratch_operands = 0 : i64, tpu.core_type = #tpu.core_type<tc>, window_params = [{transform_indices = @transform_0, window_bounds = array<i64: 27, 512>}, {pipeline_mode = #tpu.pipeline_mode<synchronous>, transform_indices = @transform_1, window_bounds = array<i64: 32, 27>}, {pipeline_mode = #tpu.pipeline_mode<synchronous>, transform_indices = @transform_2, window_bounds = array<i64: 32, 1>}, {pipeline_mode = #tpu.pipeline_mode<synchronous>, transform_indices = @transform_3, window_bounds = array<i64: 32, 32>}, {pipeline_mode = #tpu.pipeline_mode<synchronous>, transform_indices = @transform_4, window_bounds = array<i64: 32, 1>}, {pipeline_mode = #tpu.pipeline_mode<synchronous>, transform_indices = @transform_5, window_bounds = array<i64: 16, 32>}, {pipeline_mode = #tpu.pipeline_mode<synchronous>, transform_indices = @transform_6, window_bounds = array<i64: 16, 1>}, {transform_indices = @transform_7, window_bounds = array<i64: 16, 512>}]} {
    %c0 = arith.constant 0 : index
    %c0_0 = arith.constant 0 : index
    %0 = vector.load %arg2[%c0, %c0_0] : memref<32x27xbf16, #tpu.memory_space<vmem>>, vector<32x27xbf16>
    %c0_1 = arith.constant 0 : index
    %c0_2 = arith.constant 0 : index
    %1 = vector.load %arg1[%c0_1, %c0_2] : memref<27x512xbf16, #tpu.memory_space<vmem>>, vector<27x512xbf16>
    %cst = arith.constant dense<0.000000e+00> : vector<32x512xf32>
    %2 = tpu.matmul %0, %1, %cst {dimension_numbers = #tpu.dot_dimension_numbers<[1], [0], [0], [1], [0, 0, 1, 1], [], []>} : vector<32x27xbf16>, vector<27x512xbf16>, vector<32x512xf32> -> vector<32x512xf32>
    %c0_3 = arith.constant 0 : index
    %c0_4 = arith.constant 0 : index
    %3 = vector.load %arg3[%c0_3, %c0_4] : memref<32x1xf32, #tpu.memory_space<vmem>>, vector<32x1xf32>
    %4 = vector.broadcast %3 : vector<32x1xf32> to vector<32x512xf32>
    %5 = arith.addf %2, %4 : vector<32x512xf32>
    %cst_5 = arith.constant 0.000000e+00 : f32
    %6 = vector.broadcast %cst_5 : f32 to vector<32x512xf32>
    %7 = arith.maximumf %5, %6 : vector<32x512xf32>
    %c0_6 = arith.constant 0 : index
    %c0_7 = arith.constant 0 : index
    %8 = vector.load %arg4[%c0_6, %c0_7] : memref<32x32xbf16, #tpu.memory_space<vmem>>, vector<32x32xbf16>
    %9 = arith.truncf %7 : vector<32x512xf32> to vector<32x512xbf16>
    %cst_8 = arith.constant dense<0.000000e+00> : vector<32x512xf32>
    %10 = tpu.matmul %8, %9, %cst_8 {dimension_numbers = #tpu.dot_dimension_numbers<[1], [0], [0], [1], [0, 0, 1, 1], [], []>} : vector<32x32xbf16>, vector<32x512xbf16>, vector<32x512xf32> -> vector<32x512xf32>
    %c0_9 = arith.constant 0 : index
    %c0_10 = arith.constant 0 : index
    %11 = vector.load %arg5[%c0_9, %c0_10] : memref<32x1xf32, #tpu.memory_space<vmem>>, vector<32x1xf32>
    %12 = vector.broadcast %11 : vector<32x1xf32> to vector<32x512xf32>
    %13 = arith.addf %10, %12 : vector<32x512xf32>
    %cst_11 = arith.constant 0.000000e+00 : f32
    %14 = vector.broadcast %cst_11 : f32 to vector<32x512xf32>
    %15 = arith.maximumf %13, %14 : vector<32x512xf32>
    %c0_12 = arith.constant 0 : index
    %c0_13 = arith.constant 0 : index
    %16 = vector.load %arg6[%c0_12, %c0_13] : memref<16x32xbf16, #tpu.memory_space<vmem>>, vector<16x32xbf16>
    %17 = arith.truncf %15 : vector<32x512xf32> to vector<32x512xbf16>
    %cst_14 = arith.constant dense<0.000000e+00> : vector<16x512xf32>
    %18 = tpu.matmul %16, %17, %cst_14 {dimension_numbers = #tpu.dot_dimension_numbers<[1], [0], [0], [1], [0, 0, 1, 1], [], []>} : vector<16x32xbf16>, vector<32x512xbf16>, vector<16x512xf32> -> vector<16x512xf32>
    %c0_15 = arith.constant 0 : index
    %c0_16 = arith.constant 0 : index
    %19 = vector.load %arg7[%c0_15, %c0_16] : memref<16x1xf32, #tpu.memory_space<vmem>>, vector<16x1xf32>
    %20 = vector.broadcast %19 : vector<16x1xf32> to vector<16x512xf32>
    %21 = arith.addf %18, %20 : vector<16x512xf32>
    %c0_17 = arith.constant 0 : index
    %c0_18 = arith.constant 0 : index
    %22 = vector.load %arg8[%c0_17, %c0_18] : memref<16x512xf32, #tpu.memory_space<vmem>>, vector<16x512xf32>
    tpu.vector_store %arg8[%c0_17, %c0_18], %21 {strides = array<i32>} : memref<16x512xf32, #tpu.memory_space<vmem>>, vector<16x512xf32>,
    return
  }
  func.func @transform_0(%arg0: i32) -> (i32, i32) {
    %c0_i32 = arith.constant 0 : i32
    %c0_i32_0 = arith.constant 0 : i32
    return %c0_i32, %arg0 : i32, i32
  }
  func.func @transform_1(%arg0: i32) -> (i32, i32) {
    %c0_i32 = arith.constant 0 : i32
    %c0_i32_0 = arith.constant 0 : i32
    %c0_i32_1 = arith.constant 0 : i32
    return %c0_i32, %c0_i32_0 : i32, i32
  }
  func.func @transform_2(%arg0: i32) -> (i32, i32) {
    %c0_i32 = arith.constant 0 : i32
    %c0_i32_0 = arith.constant 0 : i32
    %c0_i32_1 = arith.constant 0 : i32
    return %c0_i32, %c0_i32_0 : i32, i32
  }
  func.func @transform_3(%arg0: i32) -> (i32, i32) {
    %c0_i32 = arith.constant 0 : i32
    %c0_i32_0 = arith.constant 0 : i32
    %c0_i32_1 = arith.constant 0 : i32
    return %c0_i32, %c0_i32_0 : i32, i32
  }
  func.func @transform_4(%arg0: i32) -> (i32, i32) {
    %c0_i32 = arith.constant 0 : i32
    %c0_i32_0 = arith.constant 0 : i32
    %c0_i32_1 = arith.constant 0 : i32
    return %c0_i32, %c0_i32_0 : i32, i32
  }
  func.func @transform_5(%arg0: i32) -> (i32, i32) {
    %c0_i32 = arith.constant 0 : i32
    %c0_i32_0 = arith.constant 0 : i32
    %c0_i32_1 = arith.constant 0 : i32
    return %c0_i32, %c0_i32_0 : i32, i32
  }
  func.func @transform_6(%arg0: i32) -> (i32, i32) {
    %c0_i32 = arith.constant 0 : i32
    %c0_i32_0 = arith.constant 0 : i32
    %c0_i32_1 = arith.constant 0 : i32
    return %c0_i32, %c0_i32_0 : i32, i32
  }
  func.func @transform_7(%arg0: i32) -> (i32, i32) {
    %c0_i32 = arith.constant 0 : i32
    %c0_i32_0 = arith.constant 0 : i32
    return %c0_i32, %arg0 : i32, i32
  }
}

</mosaic_0001>

<llo_original>
// kernel: tpu_custom_call.1
$region0: #{tpu_custom_call.1}
  #allocation0 [shape = 'u32[]', space=smem, size = 0x4, offset = 0x4, fixed_abs, tag = 'smem constant byte address 0x4 - core index']
  #allocation1 [shape = 'u32[72,128]{1,0:T(1,128)}', space=vmem, size = 0x9000, scoped, tag = 'internal scratch']
  %s0 = inlined_call_operand.hbm [shape: bf16[27,1024], index: 0, kind: input, shape index: {}]
  %s1 = inlined_call_operand.vmem [shape: bf16[32,27], index: 1, kind: input, shape index: {}]
  %s2 = inlined_call_operand.vmem [shape: f32[32,1], index: 2, kind: input, shape index: {}]
  %s3 = inlined_call_operand.vmem [shape: bf16[32,32], index: 3, kind: input, shape index: {}]
  %s4 = inlined_call_operand.vmem [shape: f32[32,1], index: 4, kind: input, shape index: {}]
  %s5 = inlined_call_operand.vmem [shape: bf16[16,32], index: 5, kind: input, shape index: {}]
  %s6 = inlined_call_operand.vmem [shape: f32[16,1], index: 6, kind: input, shape index: {}]
  %s7 = inlined_call_operand.hbm [shape: f32[16,1024], index: 7, kind: output, shape index: {}]
  %s8 = sld [smem:[#allocation0]]
  $region65: #{tpu_custom_call.1} parent=0
    _
  %s10 = ssub.s32 1, %s8
  %s11 = scalar_select 0, %s10, %s8
  $region1: #{tpu_custom_call.1} parent=0
    #allocation2 [shape = 'u8[65536]{0}', space=vmem, size = 0x10000, scoped, tag = 'input window, operand 0']
    #allocation3 [shape = 's32[2]{0}', space=sflag, size = 0x8, scoped, tag = 'scoped memory for tpu_custom_call.1']
    #allocation4 [shape = 's32[2]{0}', space=sflag, size = 0x8, scoped, tag = 'scoped memory for tpu_custom_call.1']
    #allocation5 [shape = 'u8[65536]{0}', space=vmem, size = 0x10000, scoped, tag = 'output window, operand 0']
    %12 = vsyncpa [#allocation3], 0
    %s13 = scalar_lea.sflag [#allocation3], 1
    %14 = vsyncpa %s13, 0
    %15 = vsyncpa [#allocation4], 0
    %s16 = scalar_lea.sflag [#allocation4], 1
    %17 = vsyncpa %s16, 0
    loop: start=0, step=1, limit=4
    $region2: #{tpu_custom_call.1} parent=1 // loop_pre_header
      _
    $region3: #{tpu_custom_call.1} parent=1 // loop_header
      %s19 = sphi 0, %s23
      %p20 = scmp.ge.s32.totalorder %s19, 4
      %s29 = sphi 0, %s31
      %s32 = sphi 0, %s29
      %s33 = sphi 0, %s32
      %s49 = sphi 0, %s33
      %s53 = sphi 0, %s53
      %s55 = sphi 0, %s53
      %s56 = sphi 0, %s55
      %s70 = sphi 0, %s56
      %s74 = sphi 0, %s74
      %s76 = sphi 0, %s74
      %s77 = sphi 0, %s76
      %s91 = sphi 0, %s77
      %s95 = sphi 0, %s95
      %s97 = sphi 0, %s95
      %s98 = sphi 0, %s97
      %s112 = sphi 0, %s98
      %s116 = sphi 0, %s116
      %s118 = sphi 0, %s116
      %s119 = sphi 0, %s118
      %s133 = sphi 0, %s119
      %s137 = sphi 0, %s137
      %s139 = sphi 0, %s137
      %s140 = sphi 0, %s139
      %s154 = sphi 0, %s140
      %s158 = sphi 0, %s158
      %s160 = sphi 0, %s158
      %s161 = sphi 0, %s160
      %s175 = sphi 0, %s161
      %s181 = sphi 0, %s183
      %s184 = sphi 0, %s181
      %s185 = sphi 0, %s184
      %s201 = sphi 0, %s185
    $region4: #{tpu_custom_call.1} parent=1 // loop_header_branch
      %22 = sbr.rel (%p20) target = $region8
    $region5: #{tpu_custom_call.1} parent=1 // loop_body
      %s24 = ssub.s32 %s19, 1
      %s25 = ssub.s32 %s19, 2
      %s26 = sadd.s32 %s19, 1
      %s27 = ssub.s32 %s19, %s26
      %p28 = scmp.eq.s32.totalorder %s27, 0
      %s30 = sadd.s32 %s29, 1
      %s31 = scalar_select %p28, %s29, %s30
      %p34 = pneg %p28
      %p35 = scmp.eq.s32.totalorder %s19, 1
      %p36 = por %p34, %p35
      %p37 = scmp.ne.s32.totalorder %s29, %s32
      %p38 = scmp.eq.s32.totalorder %s19, 0
      %p39 = por %p37, %p38
      %p40 = scmp.ne.s32.totalorder %s29, %s32
      %p41 = scmp.eq.s32.totalorder %s24, 1
      %p42 = por %p40, %p41
      %p43 = scmp.ne.s32.totalorder %s32, %s33
      %p44 = scmp.eq.s32.totalorder %s24, 0
      %p45 = por %p43, %p44
      %p46 = scmp.ne.s32.totalorder %s32, %s33
      %p47 = scmp.eq.s32.totalorder %s25, 1
      %p48 = por %p46, %p47
      %p50 = scmp.ne.s32.totalorder %s33, %s49
      %p51 = scmp.eq.s32.totalorder %s25, 0
      %p52 = por %p50, %p51
      %s54 = sadd.s32 %s53, 1
      %p57 = scmp.eq.s32.totalorder %s19, 1
      %p58 = scmp.ne.s32.totalorder %s53, %s55
      %p59 = scmp.eq.s32.totalorder %s19, 0
      %p60 = por %p58, %p59
      %p61 = scmp.ne.s32.totalorder %s53, %s55
      %p62 = scmp.eq.s32.totalorder %s24, 1
      %p63 = por %p61, %p62
      %p64 = scmp.ne.s32.totalorder %s55, %s56
      %p65 = scmp.eq.s32.totalorder %s24, 0
      %p66 = por %p64, %p65
      %p67 = scmp.ne.s32.totalorder %s55, %s56
      %p68 = scmp.eq.s32.totalorder %s25, 1
      %p69 = por %p67, %p68
      %p71 = scmp.ne.s32.totalorder %s56, %s70
      %p72 = scmp.eq.s32.totalorder %s25, 0
      %p73 = por %p71, %p72
      %s75 = sadd.s32 %s74, 1
      %p78 = scmp.eq.s32.totalorder %s19, 1
      %p79 = scmp.ne.s32.totalorder %s74, %s76
      %p80 = scmp.eq.s32.totalorder %s19, 0
      %p81 = por %p79, %p80
      %p82 = scmp.ne.s32.totalorder %s74, %s76
      %p83 = scmp.eq.s32.totalorder %s24, 1
      %p84 = por %p82, %p83
      %p85 = scmp.ne.s32.totalorder %s76, %s77
      %p86 = scmp.eq.s32.totalorder %s24, 0
      %p87 = por %p85, %p86
      %p88 = scmp.ne.s32.totalorder %s76, %s77
      %p89 = scmp.eq.s32.totalorder %s25, 1
      %p90 = por %p88, %p89
      %p92 = scmp.ne.s32.totalorder %s77, %s91
      %p93 = scmp.eq.s32.totalorder %s25, 0
      %p94 = por %p92, %p93
      %s96 = sadd.s32 %s95, 1
      %p99 = scmp.eq.s32.totalorder %s19, 1
      %p100 = scmp.ne.s32.totalorder %s95, %s97
      %p101 = scmp.eq.s32.totalorder %s19, 0
      %p102 = por %p100, %p101
      %p103 = scmp.ne.s32.totalorder %s95, %s97
      %p104 = scmp.eq.s32.totalorder %s24, 1
      %p105 = por %p103, %p104
      %p106 = scmp.ne.s32.totalorder %s97, %s98
      %p107 = scmp.eq.s32.totalorder %s24, 0
      %p108 = por %p106, %p107
      %p109 = scmp.ne.s32.totalorder %s97, %s98
      %p110 = scmp.eq.s32.totalorder %s25, 1
      %p111 = por %p109, %p110
      %p113 = scmp.ne.s32.totalorder %s98, %s112
      %p114 = scmp.eq.s32.totalorder %s25, 0
      %p115 = por %p113, %p114
      %s117 = sadd.s32 %s116, 1
      %p120 = scmp.eq.s32.totalorder %s19, 1
      %p121 = scmp.ne.s32.totalorder %s116, %s118
      %p122 = scmp.eq.s32.totalorder %s19, 0
      %p123 = por %p121, %p122
      %p124 = scmp.ne.s32.totalorder %s116, %s118
      %p125 = scmp.eq.s32.totalorder %s24, 1
      %p126 = por %p124, %p125
      %p127 = scmp.ne.s32.totalorder %s118, %s119
      %p128 = scmp.eq.s32.totalorder %s24, 0
      %p129 = por %p127, %p128
      %p130 = scmp.ne.s32.totalorder %s118, %s119
      %p131 = scmp.eq.s32.totalorder %s25, 1
      %p132 = por %p130, %p131
      %p134 = scmp.ne.s32.totalorder %s119, %s133
      %p135 = scmp.eq.s32.totalorder %s25, 0
      %p136 = por %p134, %p135
      %s138 = sadd.s32 %s137, 1
      %p141 = scmp.eq.s32.totalorder %s19, 1
      %p142 = scmp.ne.s32.totalorder %s137, %s139
      %p143 = scmp.eq.s32.totalorder %s19, 0
      %p144 = por %p142, %p143
      %p145 = scmp.ne.s32.totalorder %s137, %s139
      %p146 = scmp.eq.s32.totalorder %s24, 1
      %p147 = por %p145, %p146
      %p148 = scmp.ne.s32.totalorder %s139, %s140
      %p149 = scmp.eq.s32.totalorder %s24, 0
      %p150 = por %p148, %p149
      %p151 = scmp.ne.s32.totalorder %s139, %s140
      %p152 = scmp.eq.s32.totalorder %s25, 1
      %p153 = por %p151, %p152
      %p155 = scmp.ne.s32.totalorder %s140, %s154
      %p156 = scmp.eq.s32.totalorder %s25, 0
      %p157 = por %p155, %p156
      %s159 = sadd.s32 %s158, 1
      %p162 = scmp.eq.s32.totalorder %s19, 1
      %p163 = scmp.ne.s32.totalorder %s158, %s160
      %p164 = scmp.eq.s32.totalorder %s19, 0
      %p165 = por %p163, %p164
      %p166 = scmp.ne.s32.totalorder %s158, %s160
      %p167 = scmp.eq.s32.totalorder %s24, 1
      %p168 = por %p166, %p167
      %p169 = scmp.ne.s32.totalorder %s160, %s161
      %p170 = scmp.eq.s32.totalorder %s24, 0
      %p171 = por %p169, %p170
      %p172 = scmp.ne.s32.totalorder %s160, %s161
      %p173 = scmp.eq.s32.totalorder %s25, 1
      %p174 = por %p172, %p173
      %p176 = scmp.ne.s32.totalorder %s161, %s175
      %p177 = scmp.eq.s32.totalorder %s25, 0
      %p178 = por %p176, %p177
      %s179 = ssub.s32 %s19, %s26
      %p180 = scmp.eq.s32.totalorder %s179, 0
      %s182 = sadd.s32 %s181, 1
      %s183 = scalar_select %p180, %s181, %s182
      %p186 = pneg %p180
      %p187 = scmp.eq.s32.totalorder %s19, 1
      %p188 = por %p186, %p187
      %p189 = scmp.ne.s32.totalorder %s181, %s184
      %p190 = scmp.eq.s32.totalorder %s19, 0
      %p191 = por %p189, %p190
      %p192 = scmp.ne.s32.totalorder %s181, %s184
      %p193 = scmp.eq.s32.totalorder %s24, 1
      %p194 = por %p192, %p193
      %p195 = scmp.ne.s32.totalorder %s184, %s185
      %p196 = scmp.eq.s32.totalorder %s24, 0
      %p197 = por %p195, %p196
      %p198 = scmp.ne.s32.totalorder %s184, %s185
      %p199 = scmp.eq.s32.totalorder %s25, 1
      %p200 = por %p198, %p199
      %p202 = scmp.ne.s32.totalorder %s185, %s201
      %p203 = scmp.eq.s32.totalorder %s25, 0
      %p204 = por %p202, %p203
      %p205 = scmp.le.s32.totalorder 1, %s19
      %p206 = scmp.lt.s32.totalorder %s19, 3
      %p207 = pnand %p205, %p206
      %p208 = pneg %p207
      // Predicated region
      $region9: #{tpu_custom_call.1} parent=5 // pred_check
        _
      $region10: #{tpu_custom_call.1} parent=5 // pred_check_branch
        %210 = sbr.rel (%p207) target = $region12
      $region11: #{tpu_custom_call.1} parent=5 // pred_region
        %s211 = ssub.s32 %s19, 1
        // Predicated region
        $region13: #{tpu_custom_call.1} parent=11 // pred_check
          %p212 = pneg %p66
        $region14: #{tpu_custom_call.1} parent=11 // pred_check_branch
          %214 = sbr.rel (%p212) target = $region16
        $region15: #{tpu_custom_call.1} parent=11 // pred_region
          _
        $region16: #{tpu_custom_call.1} parent=11 // pred_fallthru
          _
        // Predicated region
        $region17: #{tpu_custom_call.1} parent=11 // pred_check
          %p215 = pneg %p87
        $region18: #{tpu_custom_call.1} parent=11 // pred_check_branch
          %217 = sbr.rel (%p215) target = $region20
        $region19: #{tpu_custom_call.1} parent=11 // pred_region
          _
        $region20: #{tpu_custom_call.1} parent=11 // pred_fallthru
          _
        // Predicated region
        $region21: #{tpu_custom_call.1} parent=11 // pred_check
          %p218 = pneg %p108
        $region22: #{tpu_custom_call.1} parent=11 // pred_check_branch
          %220 = sbr.rel (%p218) target = $region24
        $region23: #{tpu_custom_call.1} parent=11 // pred_region
          _
        $region24: #{tpu_custom_call.1} parent=11 // pred_fallthru
          _
        // Predicated region
        $region25: #{tpu_custom_call.1} parent=11 // pred_check
          %p221 = pneg %p129
        $region26: #{tpu_custom_call.1} parent=11 // pred_check_branch
          %223 = sbr.rel (%p221) target = $region28
        $region27: #{tpu_custom_call.1} parent=11 // pred_region
          _
        $region28: #{tpu_custom_call.1} parent=11 // pred_fallthru
          _
        // Predicated region
        $region29: #{tpu_custom_call.1} parent=11 // pred_check
          %p224 = pneg %p150
        $region30: #{tpu_custom_call.1} parent=11 // pred_check_branch
          %226 = sbr.rel (%p224) target = $region32
        $region31: #{tpu_custom_call.1} parent=11 // pred_region
          _
        $region32: #{tpu_custom_call.1} parent=11 // pred_fallthru
          _
        // Predicated region
        $region33: #{tpu_custom_call.1} parent=11 // pred_check
          %p227 = pneg %p171
        $region34: #{tpu_custom_call.1} parent=11 // pred_check_branch
          %229 = sbr.rel (%p227) target = $region36
        $region35: #{tpu_custom_call.1} parent=11 // pred_region
          _
        $region36: #{tpu_custom_call.1} parent=11 // pred_fallthru
          _
      $region12: #{tpu_custom_call.1} parent=5 // pred_fallthru
        _
      %p230 = scmp.lt.s32.totalorder %s19, 2
      // Predicated region
      $region37: #{tpu_custom_call.1} parent=5 // pred_check
        %p231 = pneg %p230
      $region38: #{tpu_custom_call.1} parent=5 // pred_check_branch
        %233 = sbr.rel (%p231) target = $region40
      $region39: #{tpu_custom_call.1} parent=5 // pred_region
        // Predicated region
        $region41: #{tpu_custom_call.1} parent=39 // pred_check
          %p234 = pneg %p39
        $region42: #{tpu_custom_call.1} parent=39 // pred_check_branch
          %236 = sbr.rel (%p234) target = $region44
        $region43: #{tpu_custom_call.1} parent=39 // pred_region
          %s237 = sand.u32 %s29, 1
          %s238 = scalar_lea.sflag [#allocation3], %s237
          %s239 = sand.u32 %s29, 1
          %s240 = smul.addr %s239, 64
          %s241 = scalar_lea.vmem [#allocation2], %s240
          %s242 = smul.u32 4, %s19
          %244 = vsyncadd %s238, 0
          %s245 = smul.addr %s242, 4
          %s246 = scalar_lea.hbm %s0, %s245
          %s247 = sshll.u32 %s246, 4
          %s248 = int_to_ptr.hbm [resolvable:$true] %s247
          %s249 = sshll.u32 %s241, 4
          %s250 = int_to_ptr.vmem [resolvable:$true] %s249
          %255 = dma.hbm_to_vmem [thread:$0]  %s248, 1024, %s250, %s238, 512, 256, 16
        $region44: #{tpu_custom_call.1} parent=39 // pred_fallthru
          _
      $region40: #{tpu_custom_call.1} parent=5 // pred_fallthru
        _
      %p256 = scmp.le.s32.totalorder 1, %s19
      %p257 = scmp.lt.s32.totalorder %s19, 3
      %p258 = pnand %p256, %p257
      %p259 = pneg %p258
      // Predicated region
      $region45: #{tpu_custom_call.1} parent=5 // pred_check
        _
      $region46: #{tpu_custom_call.1} parent=5 // pred_check_branch
        %261 = sbr.rel (%p258) target = $region48
      $region47: #{tpu_custom_call.1} parent=5 // pred_region
        %s262 = ssub.s32 %s19, 1
        %s263 = sand.u32 %s32, 1
        %s264 = scalar_lea.sflag [#allocation3], %s263
        %s265 = sand.u32 %s32, 1
        %s266 = smul.addr %s265, 64
        %s267 = scalar_lea.vmem [#allocation2], %s266
        // Predicated region
        $region49: #{tpu_custom_call.1} parent=47 // pred_check
          %p268 = pneg %p45
        $region50: #{tpu_custom_call.1} parent=47 // pred_check_branch
          %270 = sbr.rel (%p268) target = $region52
        $region51: #{tpu_custom_call.1} parent=47 // pred_region
          %272 = dma.done %s264, 1024
        $region52: #{tpu_custom_call.1} parent=47 // pred_fallthru
          _
        %s273 = sand.u32 %s32, 1
        %s274 = scalar_lea.sflag [#allocation3], %s273
        %s275 = sand.u32 %s32, 1
        %s276 = smul.addr %s275, 64
        %s277 = scalar_lea.vmem [#allocation2], %s276
        %p278 = pneg %p45
        %p279 = pneg %p42
        %p280 = pneg %p66
        %p281 = pneg %p63
        %p282 = pneg %p87
        %p283 = pneg %p84
        %p284 = pneg %p108
        %p285 = pneg %p105
        %p286 = pneg %p129
        %p287 = pneg %p126
        %p288 = pneg %p150
        %p289 = pneg %p147
        %p290 = pneg %p171
        %p291 = pneg %p168
        %p292 = pneg %p197
        %p293 = pneg %p194
        %s294 = sand.u32 %s184, 1
        %s295 = scalar_lea.sflag [#allocation4], %s294
        %s296 = sand.u32 %s184, 1
        %s297 = smul.addr %s296, 64
        %s298 = scalar_lea.vmem [#allocation5], %s297
        %s299 = smul.u32 4, %s24
        %s300 = smul.u32 4, %s24
        %v302 = vld [vmem:[%s1] sm:$0xf]
        %v303 = vld [vmem:[%s1 + $0x4] sm:$0xf]
        %v304 = vld [vmem:[%s1 + $0x8] sm:$0xf]
        %v305 = vld [vmem:[%s1 + $0xc] sm:$0xf]
        %v306 = vld [vmem:[%s267] sm:$0xff]
        %v307 = vld [vmem:[%s267 + $0x8] sm:$0xff]
        %v308 = vld [vmem:[%s267 + $0x10] sm:$0xff]
        %v309 = vld [vmem:[%s267 + $0x18] sm:$0xff]
        %v310 = vld [vmem:[%s267 + $0x20] sm:$0xff]
        %v311 = vld [vmem:[%s267 + $0x28] sm:$0xff]
        %v312 = vld [vmem:[%s267 + $0x30] sm:$0x33]
        %v313 = vld [vmem:[%s267 + $0x38] sm:$0x33]
        %v314 = vld [vmem:[%s2] sm:$0xff]
        %v315 = vld [vmem:[%s2 + $0x8] sm:$0xff]
        %v316 = vld [vmem:[%s2 + $0x10] sm:$0xff]
        %v317 = vld [vmem:[%s2 + $0x18] sm:$0xff]
        %319 = vset.pattern.permute.xlu0 0
        %320 = vperm.xlu0 %319, %v314
        %v321 = vpop.permute.xlu0 %320
        %324 = vset.pattern.permute.xlu0 0
        %325 = vperm.xlu0 %324, %v315
        %v326 = vpop.permute.xlu0 %325
        %329 = vset.pattern.permute.xlu0 0
        %330 = vperm.xlu0 %329, %v316
        %v331 = vpop.permute.xlu0 %330
        %334 = vset.pattern.permute.xlu0 0
        %335 = vperm.xlu0 %334, %v317
        %v336 = vpop.permute.xlu0 %335
        %v342 = vunpack.c.l.b16 %v302
        %v343 = vunpack.c.l.b16 %v303
        %v344 = vunpack.c.l.b16 %v304
        %v345 = vunpack.c.l.b16 %v305
        %v346 = vpack.c.b16 %v343, %v342
        %v347 = vpack.c.b16 %v345, %v344
        %v356 = vunpack.c.l.b16 %v306
        %v357 = vunpack.c.h.b16 %v306
        %v358 = vunpack.c.l.b16 %v307
        %v359 = vunpack.c.h.b16 %v307
        %v360 = vunpack.c.l.b16 %v308
        %v361 = vunpack.c.h.b16 %v308
        %v362 = vunpack.c.l.b16 %v309
        %v363 = vunpack.c.h.b16 %v309
        %v364 = vunpack.c.l.b16 %v310
        %v365 = vunpack.c.h.b16 %v310
        %v366 = vunpack.c.l.b16 %v311
        %v367 = vunpack.c.h.b16 %v311
        %v368 = vunpack.c.l.b16 %v312
        %v369 = vunpack.c.h.b16 %v312
        %v370 = vunpack.c.l.b16 %v313
        %v371 = vunpack.c.h.b16 %v313
        %v372 = vpack.c.b16 %v360, %v356
        %v373 = vpack.c.b16 %v361, %v357
        %v374 = vpack.c.b16 %v362, %v358
        %v375 = vpack.c.b16 %v363, %v359
        %v376 = vpack.c.b16 %v368, %v364
        %v377 = vpack.c.b16 %v369, %v365
        %v378 = vpack.c.b16 %v370, %v366
        %v379 = vpack.c.b16 %v371, %v367
        %vm384 = vcmask 220160
        %v386 = vsel %vm384, %v346, 0
        %v389 = vsel %vm384, %v347, 0
        %vm391 = vcmask 1044480
        %vm392 = vcmask 1045504
        %v393 = vsel %vm391, 4294967295, 65535
        %v394 = vsel %vm392, %v393, 0
        %v396 = vand.u32 %v376, %v394
        %v399 = vand.u32 %v377, %v394
        %v402 = vand.u32 %v378, %v394
        %v405 = vand.u32 %v379, %v394
        %407 = vmatpush.bf16.msra.mxu0 0
        %408 = vmatpush.bf16.msra.mxu0 0
        %409 = vmatpush.bf16.msra.mxu0 0
        %410 = vmatpush.bf16.msra.mxu0 0
        %411 = vmatpush.bf16.msra.mxu0 0
        %412 = vmatpush.bf16.msra.mxu0 0
        %413 = vmatpush.bf16.msra.mxu0 %v396
        %414 = vmatpush.bf16.msra.mxu0 %v372
        %415 = vmatmul.bf16.gmra.mxu0 %v386
        %v416 = vpop.f32.mrf.mxu0
        %v417 = vadd.f32 %v321, %v416
        %v418 = vpop.f32.mrf.mxu0
        %v419 = vadd.f32 %v326, %v418
        %420 = vmatmul.bf16.gmra.mxu0 %v389
        %v421 = vpop.f32.mrf.mxu0
        %v422 = vadd.f32 %v331, %v421
        %v423 = vpop.f32.mrf.mxu0
        %v424 = vadd.f32 %v336, %v423
        %425 = vdwg.mxu0
        %426 = vmatpush.bf16.msra.mxu0 0
        %427 = vmatpush.bf16.msra.mxu0 0
        %428 = vmatpush.bf16.msra.mxu0 0
        %429 = vmatpush.bf16.msra.mxu0 0
        %430 = vmatpush.bf16.msra.mxu0 0
        %431 = vmatpush.bf16.msra.mxu0 0
        %432 = vmatpush.bf16.msra.mxu0 %v399
        %433 = vmatpush.bf16.msra.mxu0 %v373
        %434 = vmatmul.bf16.gmra.mxu0 %v386
        %v435 = vpop.f32.mrf.mxu0
        %v436 = vadd.f32 %v321, %v435
        %v437 = vpop.f32.mrf.mxu0
        %v438 = vadd.f32 %v326, %v437
        %439 = vmatmul.bf16.gmra.mxu0 %v389
        %v440 = vpop.f32.mrf.mxu0
        %v441 = vadd.f32 %v331, %v440
        %v442 = vpop.f32.mrf.mxu0
        %v443 = vadd.f32 %v336, %v442
        %444 = vdwg.mxu0
        %445 = vmatpush.bf16.msra.mxu0 0
        %446 = vmatpush.bf16.msra.mxu0 0
        %447 = vmatpush.bf16.msra.mxu0 0
        %448 = vmatpush.bf16.msra.mxu0 0
        %449 = vmatpush.bf16.msra.mxu0 0
        %450 = vmatpush.bf16.msra.mxu0 0
        %451 = vmatpush.bf16.msra.mxu0 %v402
        %452 = vmatpush.bf16.msra.mxu0 %v374
        %453 = vmatmul.bf16.gmra.mxu0 %v386
        %v454 = vpop.f32.mrf.mxu0
        %v455 = vadd.f32 %v321, %v454
        %v456 = vpop.f32.mrf.mxu0
        %v457 = vadd.f32 %v326, %v456
        %458 = vmatmul.bf16.gmra.mxu0 %v389
        %v459 = vpop.f32.mrf.mxu0
        %v460 = vadd.f32 %v331, %v459
        %v461 = vpop.f32.mrf.mxu0
        %v462 = vadd.f32 %v336, %v461
        %463 = vdwg.mxu0
        %464 = vmatpush.bf16.msra.mxu0 0
        %465 = vmatpush.bf16.msra.mxu0 0
        %466 = vmatpush.bf16.msra.mxu0 0
        %467 = vmatpush.bf16.msra.mxu0 0
        %468 = vmatpush.bf16.msra.mxu0 0
        %469 = vmatpush.bf16.msra.mxu0 0
        %470 = vmatpush.bf16.msra.mxu0 %v405
        %471 = vmatpush.bf16.msra.mxu0 %v375
        %472 = vmatmul.bf16.gmra.mxu0 %v386
        %v473 = vpop.f32.mrf.mxu0
        %v474 = vadd.f32 %v321, %v473
        %v475 = vpop.f32.mrf.mxu0
        %v476 = vadd.f32 %v326, %v475
        %477 = vmatmul.bf16.gmra.mxu0 %v389
        %v478 = vpop.f32.mrf.mxu0
        %v479 = vadd.f32 %v331, %v478
        %v480 = vpop.f32.mrf.mxu0
        %v481 = vadd.f32 %v336, %v480
        %482 = vdwg.mxu0
        %v483 = vmax.f32 %v417, 0.0
        %v484 = vmax.f32 %v436, 0.0
        %v485 = vmax.f32 %v455, 0.0
        %v486 = vmax.f32 %v474, 0.0
        %v487 = vmax.f32 %v419, 0.0
        %v488 = vmax.f32 %v438, 0.0
        %v489 = vmax.f32 %v457, 0.0
        %v490 = vmax.f32 %v476, 0.0
        %v491 = vmax.f32 %v422, 0.0
        %v492 = vmax.f32 %v441, 0.0
        %v493 = vmax.f32 %v460, 0.0
        %v494 = vmax.f32 %v479, 0.0
        %v495 = vmax.f32 %v424, 0.0
        %v496 = vmax.f32 %v443, 0.0
        %v497 = vmax.f32 %v462, 0.0
        %v498 = vmax.f32 %v481, 0.0
        %v499 = vld [vmem:[%s3] sm:$0xf]
        %v500 = vld [vmem:[%s3 + $0x4] sm:$0xf]
        %v501 = vld [vmem:[%s3 + $0x8] sm:$0xf]
        %v502 = vld [vmem:[%s3 + $0xc] sm:$0xf]
        %v503 = vpack.c.bf16 %v487, %v483
        %v504 = vpack.c.bf16 %v488, %v484
        %v505 = vpack.c.bf16 %v489, %v485
        %v506 = vpack.c.bf16 %v490, %v486
        %v507 = vpack.c.bf16 %v495, %v491
        %v508 = vpack.c.bf16 %v496, %v492
        %v509 = vpack.c.bf16 %v497, %v493
        %v510 = vpack.c.bf16 %v498, %v494
        %v511 = vld [vmem:[%s4] sm:$0xff]
        %v512 = vld [vmem:[%s4 + $0x8] sm:$0xff]
        %v513 = vld [vmem:[%s4 + $0x10] sm:$0xff]
        %v514 = vld [vmem:[%s4 + $0x18] sm:$0xff]
        %516 = vset.pattern.permute.xlu0 0
        %517 = vperm.xlu0 %516, %v511
        %v518 = vpop.permute.xlu0 %517
        %521 = vset.pattern.permute.xlu0 0
        %522 = vperm.xlu0 %521, %v512
        %v523 = vpop.permute.xlu0 %522
        %526 = vset.pattern.permute.xlu0 0
        %527 = vperm.xlu0 %526, %v513
        %v528 = vpop.permute.xlu0 %527
        %531 = vset.pattern.permute.xlu0 0
        %532 = vperm.xlu0 %531, %v514
        %v533 = vpop.permute.xlu0 %532
        %v539 = vunpack.c.l.b16 %v499
        %v540 = vunpack.c.l.b16 %v500
        %v541 = vunpack.c.l.b16 %v501
        %v542 = vunpack.c.l.b16 %v502
        %v543 = vpack.c.b16 %v540, %v539
        %v544 = vpack.c.b16 %v542, %v541
        %vm545 = vcmask 261120
        %v547 = vsel %vm545, %v543, 0
        %v550 = vsel %vm545, %v544, 0
        %552 = vmatpush.bf16.msra.mxu0 0
        %553 = vmatpush.bf16.msra.mxu0 0
        %554 = vmatpush.bf16.msra.mxu0 0
        %555 = vmatpush.bf16.msra.mxu0 0
        %556 = vmatpush.bf16.msra.mxu0 0
        %557 = vmatpush.bf16.msra.mxu0 0
        %558 = vmatpush.bf16.msra.mxu0 %v507
        %559 = vmatpush.bf16.msra.mxu0 %v503
        %560 = vmatmul.bf16.gmra.mxu0 %v547
        %v561 = vpop.f32.mrf.mxu0
        %v562 = vadd.f32 %v518, %v561
        %v563 = vpop.f32.mrf.mxu0
        %v564 = vadd.f32 %v523, %v563
        %565 = vmatmul.bf16.gmra.mxu0 %v550
        %v566 = vpop.f32.mrf.mxu0
        %v567 = vadd.f32 %v528, %v566
        %v568 = vpop.f32.mrf.mxu0
        %v569 = vadd.f32 %v533, %v568
        %570 = vdwg.mxu0
        %571 = vmatpush.bf16.msra.mxu0 0
        %572 = vmatpush.bf16.msra.mxu0 0
        %573 = vmatpush.bf16.msra.mxu0 0
        %574 = vmatpush.bf16.msra.mxu0 0
        %575 = vmatpush.bf16.msra.mxu0 0
        %576 = vmatpush.bf16.msra.mxu0 0
        %577 = vmatpush.bf16.msra.mxu0 %v508
        %578 = vmatpush.bf16.msra.mxu0 %v504
        %579 = vmatmul.bf16.gmra.mxu0 %v547
        %v580 = vpop.f32.mrf.mxu0
        %v581 = vadd.f32 %v518, %v580
        %v582 = vpop.f32.mrf.mxu0
        %v583 = vadd.f32 %v523, %v582
        %584 = vmatmul.bf16.gmra.mxu0 %v550
        %v585 = vpop.f32.mrf.mxu0
        %v586 = vadd.f32 %v528, %v585
        %v587 = vpop.f32.mrf.mxu0
        %v588 = vadd.f32 %v533, %v587
        %589 = vdwg.mxu0
        %590 = vmatpush.bf16.msra.mxu0 0
        %591 = vmatpush.bf16.msra.mxu0 0
        %592 = vmatpush.bf16.msra.mxu0 0
        %593 = vmatpush.bf16.msra.mxu0 0
        %594 = vmatpush.bf16.msra.mxu0 0
        %595 = vmatpush.bf16.msra.mxu0 0
        %596 = vmatpush.bf16.msra.mxu0 %v509
        %597 = vmatpush.bf16.msra.mxu0 %v505
        %598 = vmatmul.bf16.gmra.mxu0 %v547
        %v599 = vpop.f32.mrf.mxu0
        %v600 = vadd.f32 %v518, %v599
        %v601 = vpop.f32.mrf.mxu0
        %v602 = vadd.f32 %v523, %v601
        %603 = vmatmul.bf16.gmra.mxu0 %v550
        %v604 = vpop.f32.mrf.mxu0
        %v605 = vadd.f32 %v528, %v604
        %v606 = vpop.f32.mrf.mxu0
        %v607 = vadd.f32 %v533, %v606
        %608 = vdwg.mxu0
        %609 = vmatpush.bf16.msra.mxu0 0
        %610 = vmatpush.bf16.msra.mxu0 0
        %611 = vmatpush.bf16.msra.mxu0 0
        %612 = vmatpush.bf16.msra.mxu0 0
        %613 = vmatpush.bf16.msra.mxu0 0
        %614 = vmatpush.bf16.msra.mxu0 0
        %615 = vmatpush.bf16.msra.mxu0 %v510
        %616 = vmatpush.bf16.msra.mxu0 %v506
        %617 = vmatmul.bf16.gmra.mxu0 %v547
        %v618 = vpop.f32.mrf.mxu0
        %v619 = vadd.f32 %v518, %v618
        %v620 = vpop.f32.mrf.mxu0
        %v621 = vadd.f32 %v523, %v620
        %622 = vmatmul.bf16.gmra.mxu0 %v550
        %v623 = vpop.f32.mrf.mxu0
        %v624 = vadd.f32 %v528, %v623
        %v625 = vpop.f32.mrf.mxu0
        %v626 = vadd.f32 %v533, %v625
        %627 = vdwg.mxu0
        %v628 = vmax.f32 %v562, 0.0
        %v629 = vmax.f32 %v581, 0.0
        %v630 = vmax.f32 %v600, 0.0
        %v631 = vmax.f32 %v619, 0.0
        %v632 = vmax.f32 %v564, 0.0
        %v633 = vmax.f32 %v583, 0.0
        %v634 = vmax.f32 %v602, 0.0
        %v635 = vmax.f32 %v621, 0.0
        %v636 = vmax.f32 %v567, 0.0
        %v637 = vmax.f32 %v586, 0.0
        %v638 = vmax.f32 %v605, 0.0
        %v639 = vmax.f32 %v624, 0.0
        %v640 = vmax.f32 %v569, 0.0
        %v641 = vmax.f32 %v588, 0.0
        %v642 = vmax.f32 %v607, 0.0
        %v643 = vmax.f32 %v626, 0.0
        %v644 = vld [vmem:[%s5] sm:$0xf]
        %v645 = vld [vmem:[%s5 + $0x4] sm:$0xf]
        %v646 = vpack.c.bf16 %v632, %v628
        %v647 = vpack.c.bf16 %v633, %v629
        %v648 = vpack.c.bf16 %v634, %v630
        %v649 = vpack.c.bf16 %v635, %v631
        %v650 = vpack.c.bf16 %v640, %v636
        %v651 = vpack.c.bf16 %v641, %v637
        %v652 = vpack.c.bf16 %v642, %v638
        %v653 = vpack.c.bf16 %v643, %v639
        %v654 = vld [vmem:[%s6] sm:$0xff]
        %v655 = vld [vmem:[%s6 + $0x8] sm:$0xff]
        %657 = vset.pattern.permute.xlu0 0
        %658 = vperm.xlu0 %657, %v654
        %v659 = vpop.permute.xlu0 %658
        %662 = vset.pattern.permute.xlu0 0
        %663 = vperm.xlu0 %662, %v655
        %v664 = vpop.permute.xlu0 %663
        %v668 = vunpack.c.l.b16 %v644
        %v669 = vunpack.c.l.b16 %v645
        %v670 = vpack.c.b16 %v669, %v668
        %v672 = vsel %vm545, %v670, 0
        %674 = vmatpush.bf16.msra.mxu0 0
        %675 = vmatpush.bf16.msra.mxu0 0
        %676 = vmatpush.bf16.msra.mxu0 0
        %677 = vmatpush.bf16.msra.mxu0 0
        %678 = vmatpush.bf16.msra.mxu0 0
        %679 = vmatpush.bf16.msra.mxu0 0
        %680 = vmatpush.bf16.msra.mxu0 %v650
        %681 = vmatpush.bf16.msra.mxu0 %v646
        %682 = vmatmul.bf16.gmra.mxu0 %v672
        %v683 = vpop.f32.mrf.mxu0
        %v684 = vadd.f32 %v659, %v683
        %v685 = vpop.f32.mrf.mxu0
        %v686 = vadd.f32 %v664, %v685
        %687 = vdwg.mxu0
        %688 = vmatpush.bf16.msra.mxu0 0
        %689 = vmatpush.bf16.msra.mxu0 0
        %690 = vmatpush.bf16.msra.mxu0 0
        %691 = vmatpush.bf16.msra.mxu0 0
        %692 = vmatpush.bf16.msra.mxu0 0
        %693 = vmatpush.bf16.msra.mxu0 0
        %694 = vmatpush.bf16.msra.mxu0 %v651
        %695 = vmatpush.bf16.msra.mxu0 %v647
        %696 = vmatmul.bf16.gmra.mxu0 %v672
        %v697 = vpop.f32.mrf.mxu0
        %v698 = vadd.f32 %v659, %v697
        %v699 = vpop.f32.mrf.mxu0
        %v700 = vadd.f32 %v664, %v699
        %701 = vdwg.mxu0
        %702 = vmatpush.bf16.msra.mxu0 0
        %703 = vmatpush.bf16.msra.mxu0 0
        %704 = vmatpush.bf16.msra.mxu0 0
        %705 = vmatpush.bf16.msra.mxu0 0
        %706 = vmatpush.bf16.msra.mxu0 0
        %707 = vmatpush.bf16.msra.mxu0 0
        %708 = vmatpush.bf16.msra.mxu0 %v652
        %709 = vmatpush.bf16.msra.mxu0 %v648
        %710 = vmatmul.bf16.gmra.mxu0 %v672
        %v711 = vpop.f32.mrf.mxu0
        %v712 = vadd.f32 %v659, %v711
        %v713 = vpop.f32.mrf.mxu0
        %v714 = vadd.f32 %v664, %v713
        %715 = vdwg.mxu0
        %716 = vmatpush.bf16.msra.mxu0 0
        %717 = vmatpush.bf16.msra.mxu0 0
        %718 = vmatpush.bf16.msra.mxu0 0
        %719 = vmatpush.bf16.msra.mxu0 0
        %720 = vmatpush.bf16.msra.mxu0 0
        %721 = vmatpush.bf16.msra.mxu0 0
        %722 = vmatpush.bf16.msra.mxu0 %v653
        %723 = vmatpush.bf16.msra.mxu0 %v649
        %724 = vmatmul.bf16.gmra.mxu0 %v672
        %v725 = vpop.f32.mrf.mxu0
        %v726 = vadd.f32 %v659, %v725
        %v727 = vpop.f32.mrf.mxu0
        %v728 = vadd.f32 %v664, %v727
        %729 = vdwg.mxu0
        %730 = vst [vmem:[%s298] sm:$0xff] %v684
        %731 = vst [vmem:[%s298 + $0x8] sm:$0xff] %v698
        %732 = vst [vmem:[%s298 + $0x10] sm:$0xff] %v712
        %733 = vst [vmem:[%s298 + $0x18] sm:$0xff] %v726
        %734 = vst [vmem:[%s298 + $0x20] sm:$0xff] %v686
        %735 = vst [vmem:[%s298 + $0x28] sm:$0xff] %v700
        %736 = vst [vmem:[%s298 + $0x30] sm:$0xff] %v714
        %737 = vst [vmem:[%s298 + $0x38] sm:$0xff] %v728
        %s738 = sand.u32 %s184, 1
        %s739 = scalar_lea.sflag [#allocation4], %s738
        %s740 = sand.u32 %s184, 1
        %s741 = smul.addr %s740, 64
        %s742 = scalar_lea.vmem [#allocation5], %s741
        // Predicated region
        $region53: #{tpu_custom_call.1} parent=47 // pred_check
          %p743 = pneg %p194
        $region54: #{tpu_custom_call.1} parent=47 // pred_check_branch
          %745 = sbr.rel (%p743) target = $region56
        $region55: #{tpu_custom_call.1} parent=47 // pred_region
          %s746 = smul.u32 4, %s24
          %748 = vsyncadd %s739, 0
          %s749 = smul.addr %s746, 8
          %s750 = scalar_lea.hbm %s7, %s749
          %s751 = sshll.u32 %s742, 4
          %s752 = int_to_ptr.vmem [resolvable:$true] %s751
          %s753 = sshll.u32 %s750, 4
          %s754 = int_to_ptr.hbm [resolvable:$true] %s753
          %759 = dma.vmem_to_hbm [thread:$0]  %s752, 1024, %s754, %s739, 512, 1024, 32
        $region56: #{tpu_custom_call.1} parent=47 // pred_fallthru
          _
      $region48: #{tpu_custom_call.1} parent=5 // pred_fallthru
        _
      %p760 = scmp.le.s32.totalorder 2, %s19
      // Predicated region
      $region57: #{tpu_custom_call.1} parent=5 // pred_check
        %p761 = pneg %p760
      $region58: #{tpu_custom_call.1} parent=5 // pred_check_branch
        %763 = sbr.rel (%p761) target = $region60
      $region59: #{tpu_custom_call.1} parent=5 // pred_region
        %s764 = ssub.s32 %s19, 2
        // Predicated region
        $region61: #{tpu_custom_call.1} parent=59 // pred_check
          %p765 = pneg %p200
        $region62: #{tpu_custom_call.1} parent=59 // pred_check_branch
          %767 = sbr.rel (%p765) target = $region64
        $region63: #{tpu_custom_call.1} parent=59 // pred_region
          %s768 = sand.u32 %s185, 1
          %s769 = scalar_lea.sflag [#allocation4], %s768
          %s770 = sand.u32 %s185, 1
          %s771 = smul.addr %s770, 64
          %s772 = scalar_lea.vmem [#allocation5], %s771
          %774 = dma.done %s769, 1024
        $region64: #{tpu_custom_call.1} parent=59 // pred_fallthru
          _
      $region60: #{tpu_custom_call.1} parent=5 // pred_fallthru
        _
    $region6: #{tpu_custom_call.1} parent=1 // loop_footer
      %s23 = sadd.s32 1, %s19
    $region7: #{tpu_custom_call.1} parent=1 // loop_footer_branch
      %18 = sbr.rel target = $region3
    $region8: #{tpu_custom_call.1} parent=1 // loop_exit
      _
    %775 = vsyncpa [#allocation3], 1
    %s776 = scalar_lea.sflag [#allocation3], 1
    %777 = vsyncpa %s776, 1
    %778 = vsyncpa [#allocation4], 1
    %s779 = scalar_lea.sflag [#allocation4], 1
    %780 = vsyncpa %s779, 1

</llo_original>
